<compile_context>
chip_gen: v6e
topology: v6e:2x2x1
jax: 0.10.0
libtpu: 0.0.40
codegen_flags: <defaults>
</compile_context>

<pallas_src>
import jax
import jax.numpy as jnp
from jax.experimental import pallas as pl
from jax.experimental.pallas import tpu as pltpu

LANE = 128


def _round_up(n, m):
    return ((n + m - 1) // m) * m


def policy_kernel(x_ref, w1_ref, b1_ref, w2_ref, ba_ref, o_ref):
    # x_ref : (TB, F_pad)     f32
    # w1_ref: (F_pad, H_pad)  bf16  (zero-padded rows/cols)
    # b1_ref: (1, H_pad)      f32   (zero-padded)
    # w2_ref: (H_pad, A_pad)  bf16  (zero-padded rows/cols)
    # ba_ref: (2, A_pad)      f32   row 0 = b2, row 1 = a_bound
    # o_ref : (TB, A_pad)     f32
    x16 = x_ref[...].astype(jnp.bfloat16)
    h = jnp.dot(x16, w1_ref[...], preferred_element_type=jnp.float32)
    h = jnp.maximum(h + b1_ref[...], 0.0)                    # f32 epilogue
    y = jnp.dot(h.astype(jnp.bfloat16), w2_ref[...],
                preferred_element_type=jnp.float32)
    y = jnp.tanh(y + ba_ref[0:1, :])                         # + b2
    o_ref[...] = y * ba_ref[1:2, :]                          # * a_bound


def prepare_policy_params(w1, b1, w2, b2, a_bound):
    """Pad / pack / cast the parameters ONCE (hoisted out of the hot path).

    w1: (n_features, 500), b1: (500,), w2: (500, n_actions), b2, a_bound: (n_actions,)
    """
    w1 = jnp.asarray(w1, jnp.float32)
    b1 = jnp.asarray(b1, jnp.float32).reshape(-1)
    w2 = jnp.asarray(w2, jnp.float32)
    b2 = jnp.asarray(b2, jnp.float32).reshape(-1)
    a_bound = jnp.asarray(a_bound, jnp.float32).reshape(-1)

    F, H = w1.shape
    H2, A = w2.shape
    assert H2 == H and b1.shape[0] == H and b2.shape[0] == A and a_bound.shape[0] == A

    # Pad K / lane dims to clean 128-lane tiles.  F is only padded when it is
    # large and ragged (for tiny F the extra DMA bytes outweigh the win).
    F_pad = F if F <= LANE else _round_up(F, LANE)
    H_pad = _round_up(H, LANE)
    A_pad = _round_up(A, LANE)

    # bf16 MXU operands (~3-6x matmul throughput, half the weight DMA/VMEM);
    # biases and a_bound stay f32 for an exact f32 epilogue.
    w1_p = jnp.zeros((F_pad, H_pad), jnp.bfloat16).at[:F, :H].set(
        w1.astype(jnp.bfloat16))
    b1_p = jnp.zeros((1, H_pad), jnp.float32).at[0, :H].set(b1)
    w2_p = jnp.zeros((H_pad, A_pad), jnp.bfloat16).at[:H, :A].set(
        w2.astype(jnp.bfloat16))
    ba_p = (jnp.zeros((2, A_pad), jnp.float32)
            .at[0, :A].set(b2).at[1, :A].set(a_bound))

    return {
        "w1": w1_p, "b1": b1_p, "w2": w2_p, "ba": ba_p,
        "F": F, "F_pad": F_pad, "H_pad": H_pad, "A": A, "A_pad": A_pad,
    }


def _vmem_limit_bytes(TB, F_pad, H_pad, A_pad):
    f32, bf16 = 4, 2
    io = 2 * TB * (F_pad + A_pad) * f32                       # double-buffered x / out tiles
    wts = 2 * (F_pad * H_pad * bf16 + H_pad * f32             # weights (default 2 buffers,
               + H_pad * A_pad * bf16 + 2 * A_pad * f32)      #  DMA'd once via const index_map)
    tmp = TB * (H_pad * (f32 + bf16) + 2 * A_pad * f32)       # h, h.bf16, y temporaries
    est = io + wts + tmp
    return int(min(64 * 1024 * 1024, max(32 * 1024 * 1024, 2 * est)))


def policy_forward(x, params, *, tb_max=512):
    """x: (B, n_features) f32; params from prepare_policy_params()."""
    x = jnp.asarray(x, jnp.float32)
    B, F = x.shape
    assert F == params["F"], "n_features mismatch with prepared parameters"
    F_pad, H_pad = params["F_pad"], params["H_pad"]
    A, A_pad = params["A"], params["A_pad"]

    # Balanced batch tiling:
    #  - at least 2 grid steps when B > 8 so v7x can shard the "parallel"
    #    batch axis across its 2 TensorCores,
    #  - tile size ~= ceil(B / num_tiles) rounded to 8 so padding waste stays
    #    small (instead of rounding B up to tb_max).
    num_tiles = max(1, -(-B // tb_max))
    if B > 8:
        num_tiles = max(num_tiles, 2)
    TB = _round_up(-(-B // num_tiles), 8)
    B_pad = _round_up(B, TB)

    if B_pad != B or F_pad != F:
        x = jnp.zeros((B_pad, F_pad), jnp.float32).at[:B, :F].set(x)

    out = pl.pallas_call(
        policy_kernel,
        out_shape=jax.ShapeDtypeStruct((B_pad, A_pad), jnp.float32),
        grid=(B_pad // TB,),
        in_specs=[
            pl.BlockSpec((TB, F_pad), lambda i: (i, 0)),            # x: per-tile
            pl.BlockSpec((F_pad, H_pad), lambda i: (0, 0)),         # w1: VMEM-resident
            pl.BlockSpec((1, H_pad), lambda i: (0, 0)),             # b1: resident
            pl.BlockSpec((H_pad, A_pad), lambda i: (0, 0)),         # w2: resident
            pl.BlockSpec((2, A_pad), lambda i: (0, 0)),             # b2 / a_bound packed
        ],
        out_specs=pl.BlockSpec((TB, A_pad), lambda i: (i, 0)),      # lane-dense store
        compiler_params=pltpu.CompilerParams(
            dimension_semantics=("parallel",),                      # v7x megacore
            vmem_limit_bytes=_vmem_limit_bytes(TB, F_pad, H_pad, A_pad)),
    )(x, params["w1"], params["b1"], params["w2"], params["ba"])

    return out[:B, :A]


def policy_reference_f32(x, w1, b1, w2, b2, a_bound):
    h = jnp.maximum(x @ w1 + b1, 0.0)
    return jnp.tanh(h @ w2 + b2) * a_bound


def policy_reference_bf16(x, w1, b1, w2, b2, a_bound):
    # Same bf16-operand / f32-accumulate scheme as the kernel.
    h = jnp.dot(x.astype(jnp.bfloat16), w1.astype(jnp.bfloat16),
                preferred_element_type=jnp.float32) + b1
    h = jnp.maximum(h, 0.0)
    y = jnp.dot(h.astype(jnp.bfloat16), w2.astype(jnp.bfloat16),
                preferred_element_type=jnp.float32) + b2
    return jnp.tanh(y) * a_bound


if __name__ == "__main__":
    # Small, deterministic example shapes consistent with the module.
    batch = 2
    n_features = 32
    n_actions = 8
    hidden = 500  # fixed by Policy.__init__

    key = jax.random.PRNGKey(0)
    k_x, k_w1, k_b1, k_w2, k_b2, k_ab = jax.random.split(key, 6)

    # Init mirroring the module: weights ~ N(0, 0.1), biases ~ PyTorch default.
    x = jax.random.normal(k_x, (batch, n_features), dtype=jnp.float32)
    w1 = 0.1 * jax.random.normal(k_w1, (n_features, hidden), dtype=jnp.float32)
    b1 = jax.random.uniform(
        k_b1, (hidden,), dtype=jnp.float32,
        minval=-1.0 / float(n_features) ** 0.5,
        maxval=1.0 / float(n_features) ** 0.5)
    w2 = 0.1 * jax.random.normal(k_w2, (hidden, n_actions), dtype=jnp.float32)
    b2 = jax.random.uniform(
        k_b2, (n_actions,), dtype=jnp.float32,
        minval=-1.0 / float(hidden) ** 0.5, maxval=1.0 / float(hidden) ** 0.5)
    a_bound = jax.random.uniform(
        k_ab, (n_actions,), dtype=jnp.float32, minval=0.5, maxval=2.0)

    # Pad / pack / cast the parameters once (hoisted out of the hot path).
    params = prepare_policy_params(w1, b1, w2, b2, a_bound)

    actions = policy_forward(x, params)
    jax.block_until_ready(actions)
    assert actions.shape == (batch, n_actions)

    ref16 = policy_reference_bf16(x, w1, b1, w2, b2, a_bound)
    ref32 = policy_reference_f32(x, w1, b1, w2, b2, a_bound)
    assert jnp.allclose(actions, ref16, atol=2e-3, rtol=2e-3)
    assert jnp.allclose(actions, ref32, atol=6e-2, rtol=6e-2)

    # Larger, non-tile-aligned batch: exercises the multi-step grid, balanced
    # TB selection and the megacore-parallel path.
    big_B = 517
    xb = jax.random.normal(jax.random.PRNGKey(1), (big_B, n_features),
                           dtype=jnp.float32)
    out_big = policy_forward(xb, params)
    jax.block_until_ready(out_big)
    assert out_big.shape == (big_B, n_actions)
    ref16_big = policy_reference_bf16(xb, w1, b1, w2, b2, a_bound)
    assert jnp.allclose(out_big, ref16_big, atol=2e-3, rtol=2e-3)

    print("KERNEL_OK")
</pallas_src>

<mosaic_0001>
module attributes {stable_mosaic.version = 11 : i64} {
  func.func @policy_kernel(%arg0: i32, %arg1: memref<8x32xf32, #tpu.memory_space<vmem>>, %arg2: memref<32x512xbf16, #tpu.memory_space<vmem>>, %arg3: memref<1x512xf32, #tpu.memory_space<vmem>>, %arg4: memref<512x128xbf16, #tpu.memory_space<vmem>>, %arg5: memref<2x128xf32, #tpu.memory_space<vmem>>, %arg6: memref<8x128xf32, #tpu.memory_space<vmem>>) attributes {dimension_semantics = [#tpu.dimension_semantics<parallel>], iteration_bounds = array<i64: 1>, scalar_prefetch = 0 : i64, scratch_operands = 0 : i64, tpu.core_type = #tpu.core_type<tc>, window_params = [{transform_indices = @transform_0, window_bounds = array<i64: 8, 32>}, {pipeline_mode = #tpu.pipeline_mode<synchronous>, transform_indices = @transform_1, window_bounds = array<i64: 32, 512>}, {pipeline_mode = #tpu.pipeline_mode<synchronous>, transform_indices = @transform_2, window_bounds = array<i64: 1, 512>}, {pipeline_mode = #tpu.pipeline_mode<synchronous>, transform_indices = @transform_3, window_bounds = array<i64: 512, 128>}, {pipeline_mode = #tpu.pipeline_mode<synchronous>, transform_indices = @transform_4, window_bounds = array<i64: 2, 128>}, {transform_indices = @transform_5, window_bounds = array<i64: 8, 128>}]} {
    %c0 = arith.constant 0 : index
    %c0_0 = arith.constant 0 : index
    %0 = vector.load %arg1[%c0, %c0_0] : memref<8x32xf32, #tpu.memory_space<vmem>>, vector<8x32xf32>
    %1 = arith.truncf %0 : vector<8x32xf32> to vector<8x32xbf16>
    %c0_1 = arith.constant 0 : index
    %c0_2 = arith.constant 0 : index
    %2 = vector.load %arg2[%c0_1, %c0_2] : memref<32x512xbf16, #tpu.memory_space<vmem>>, vector<32x512xbf16>
    %cst = arith.constant dense<0.000000e+00> : vector<8x512xf32>
    %3 = tpu.matmul %1, %2, %cst {dimension_numbers = #tpu.dot_dimension_numbers<[1], [0], [0], [1], [0, 0, 1, 1], [], []>} : vector<8x32xbf16>, vector<32x512xbf16>, vector<8x512xf32> -> vector<8x512xf32>
    %c0_3 = arith.constant 0 : index
    %c0_4 = arith.constant 0 : index
    %4 = vector.load %arg3[%c0_3, %c0_4] : memref<1x512xf32, #tpu.memory_space<vmem>>, vector<1x512xf32>
    %5 = vector.broadcast %4 : vector<1x512xf32> to vector<8x512xf32>
    %6 = arith.addf %3, %5 : vector<8x512xf32>
    %cst_5 = arith.constant 0.000000e+00 : f32
    %7 = vector.broadcast %cst_5 : f32 to vector<8x512xf32>
    %8 = arith.maximumf %6, %7 : vector<8x512xf32>
    %9 = arith.truncf %8 : vector<8x512xf32> to vector<8x512xbf16>
    %c0_6 = arith.constant 0 : index
    %c0_7 = arith.constant 0 : index
    %10 = vector.load %arg4[%c0_6, %c0_7] : memref<512x128xbf16, #tpu.memory_space<vmem>>, vector<512x128xbf16>
    %cst_8 = arith.constant dense<0.000000e+00> : vector<8x128xf32>
    %11 = tpu.matmul %9, %10, %cst_8 {dimension_numbers = #tpu.dot_dimension_numbers<[1], [0], [0], [1], [0, 0, 1, 1], [], []>} : vector<8x512xbf16>, vector<512x128xbf16>, vector<8x128xf32> -> vector<8x128xf32>
    %c0_9 = arith.constant 0 : index
    %c0_10 = arith.constant 0 : index
    %12 = vector.load %arg5[%c0_9, %c0_10] : memref<2x128xf32, #tpu.memory_space<vmem>>, vector<1x128xf32>
    %13 = vector.broadcast %12 : vector<1x128xf32> to vector<8x128xf32>
    %14 = arith.addf %11, %13 : vector<8x128xf32>
    %15 = math.tanh %14 : vector<8x128xf32>
    %c1 = arith.constant 1 : index
    %c0_11 = arith.constant 0 : index
    %16 = vector.load %arg5[%c1, %c0_11] : memref<2x128xf32, #tpu.memory_space<vmem>>, vector<1x128xf32>
    %17 = vector.broadcast %16 : vector<1x128xf32> to vector<8x128xf32>
    %18 = arith.mulf %15, %17 : vector<8x128xf32>
    %c0_12 = arith.constant 0 : index
    %c0_13 = arith.constant 0 : index
    %19 = vector.load %arg6[%c0_12, %c0_13] : memref<8x128xf32, #tpu.memory_space<vmem>>, vector<8x128xf32>
    tpu.vector_store %arg6[%c0_12, %c0_13], %18 {strides = array<i32>} : memref<8x128xf32, #tpu.memory_space<vmem>>, vector<8x128xf32>,
    return
  }
  func.func @transform_0(%arg0: i32) -> (i32, i32) {
    %c0_i32 = arith.constant 0 : i32
    %c0_i32_0 = arith.constant 0 : i32
    return %arg0, %c0_i32 : i32, i32
  }
  func.func @transform_1(%arg0: i32) -> (i32, i32) {
    %c0_i32 = arith.constant 0 : i32
    %c0_i32_0 = arith.constant 0 : i32
    %c0_i32_1 = arith.constant 0 : i32
    return %c0_i32, %c0_i32_0 : i32, i32
  }
  func.func @transform_2(%arg0: i32) -> (i32, i32) {
    %c0_i32 = arith.constant 0 : i32
    %c0_i32_0 = arith.constant 0 : i32
    %c0_i32_1 = arith.constant 0 : i32
    return %c0_i32, %c0_i32_0 : i32, i32
  }
  func.func @transform_3(%arg0: i32) -> (i32, i32) {
    %c0_i32 = arith.constant 0 : i32
    %c0_i32_0 = arith.constant 0 : i32
    %c0_i32_1 = arith.constant 0 : i32
    return %c0_i32, %c0_i32_0 : i32, i32
  }
  func.func @transform_4(%arg0: i32) -> (i32, i32) {
    %c0_i32 = arith.constant 0 : i32
    %c0_i32_0 = arith.constant 0 : i32
    %c0_i32_1 = arith.constant 0 : i32
    return %c0_i32, %c0_i32_0 : i32, i32
  }
  func.func @transform_5(%arg0: i32) -> (i32, i32) {
    %c0_i32 = arith.constant 0 : i32
    %c0_i32_0 = arith.constant 0 : i32
    return %arg0, %c0_i32 : i32, i32
  }
}

</mosaic_0001>

<llo_original>
// kernel: tpu_custom_call.1
$region0: #{tpu_custom_call.1}
  #allocation0 [shape = 'u32[]', space=smem, size = 0x4, offset = 0x4, fixed_abs, tag = 'smem constant byte address 0x4 - core index']
  #allocation1 [shape = 'u32[144,128]{1,0:T(1,128)}', space=vmem, size = 0x12000, scoped, tag = 'internal scratch']
  %s0 = inlined_call_operand.hbm [shape: f32[8,32], index: 0, kind: input, shape index: {}]
  %s1 = inlined_call_operand.hbm [shape: bf16[32,512], index: 1, kind: input, shape index: {}]
  %s2 = inlined_call_operand.hbm [shape: f32[1,512], index: 2, kind: input, shape index: {}]
  %s3 = inlined_call_operand.hbm [shape: bf16[512,128], index: 3, kind: input, shape index: {}]
  %s4 = inlined_call_operand.vmem [shape: f32[2,128], index: 4, kind: input, shape index: {}]
  %s5 = inlined_call_operand.hbm [shape: f32[8,128], index: 5, kind: output, shape index: {}]
  %s6 = sld [smem:[#allocation0]]
  $region46: #{tpu_custom_call.1} parent=0
    _
  %s8 = ssub.s32 1, %s6
  %s9 = scalar_select 0, %s8, %s6
  $region1: #{tpu_custom_call.1} parent=0
    #allocation2 [shape = 'u8[4096]{0}', space=vmem, size = 0x1000, scoped, tag = 'input window, operand 0, single buffered']
    #allocation3 [shape = 's32[1]{0}', space=sflag, size = 0x4, scoped, tag = 'scoped memory for tpu_custom_call.1']
    #allocation4 [shape = 's32[1]{0}', space=sflag, size = 0x4, scoped, tag = 'scoped memory for tpu_custom_call.1']
    #allocation5 [shape = 'u8[32768]{0}', space=vmem, size = 0x8000, scoped, tag = 'input window, operand 1, single buffered']
    #allocation6 [shape = 's32[1]{0}', space=sflag, size = 0x4, scoped, tag = 'scoped memory for tpu_custom_call.1']
    #allocation7 [shape = 'u8[2048]{0}', space=vmem, size = 0x800, scoped, tag = 'input window, operand 2, single buffered']
    #allocation8 [shape = 'u8[131072]{0}', space=vmem, size = 0x20000, scoped, tag = 'input window, operand 3, single buffered']
    #allocation9 [shape = 's32[1]{0}', space=sflag, size = 0x4, scoped, tag = 'scoped memory for tpu_custom_call.1']
    #allocation10 [shape = 'u8[4096]{0}', space=vmem, size = 0x1000, scoped, tag = 'output window, operand 0, single buffered']
    %10 = vsyncpa [#allocation3], 0
    %11 = vsyncpa [#allocation6], 0
    %12 = vsyncpa [#allocation9], 0
    %13 = vsyncpa [#allocation4], 0
    // Predicated region
    $region2: #{tpu_custom_call.1} parent=1 // pred_check
      _
    $region3: #{tpu_custom_call.1} parent=1 // pred_check_branch
      %15 = sbr.rel (0) target = $region5
    $region4: #{tpu_custom_call.1} parent=1 // pred_region
      %s17 = ssub.s32 128, 128
      %18 = vsyncadd [#allocation3], %s17
      %s20 = sshll.u32 [#allocation2], 4
      %s21 = int_to_ptr.vmem [resolvable:$true] %s20
      %23 = dma.hbm_to_vmem [thread:$0]  %s0, 128, %s21, [#allocation3]
    $region5: #{tpu_custom_call.1} parent=1 // pred_fallthru
      _
    // Predicated region
    $region6: #{tpu_custom_call.1} parent=1 // pred_check
      _
    $region7: #{tpu_custom_call.1} parent=1 // pred_check_branch
      %25 = sbr.rel (0) target = $region9
    $region8: #{tpu_custom_call.1} parent=1 // pred_region
      %s27 = ssub.s32 1024, 1024
      %28 = vsyncadd [#allocation6], %s27
      %s29 = sshll.u32 [#allocation5], 4
      %s30 = int_to_ptr.vmem [resolvable:$true] %s29
      %35 = dma.hbm_to_vmem [thread:$0]  %s1, 1024, %s30, [#allocation6], 256, 256, 16
    $region9: #{tpu_custom_call.1} parent=1 // pred_fallthru
      _
    // Predicated region
    $region10: #{tpu_custom_call.1} parent=1 // pred_check
      _
    $region11: #{tpu_custom_call.1} parent=1 // pred_check_branch
      %37 = sbr.rel (0) target = $region13
    $region12: #{tpu_custom_call.1} parent=1 // pred_region
      %s39 = ssub.s32 64, 64
      %40 = vsyncadd [#allocation6], %s39
      %s42 = sshll.u32 [#allocation7], 4
      %s43 = int_to_ptr.vmem [resolvable:$true] %s42
      %45 = dma.hbm_to_vmem [thread:$0]  %s2, 64, %s43, [#allocation6]
    $region13: #{tpu_custom_call.1} parent=1 // pred_fallthru
      _
    // Predicated region
    $region14: #{tpu_custom_call.1} parent=1 // pred_check
      _
    $region15: #{tpu_custom_call.1} parent=1 // pred_check_branch
      %47 = sbr.rel (0) target = $region17
    $region16: #{tpu_custom_call.1} parent=1 // pred_region
      %s49 = ssub.s32 4096, 4096
      %50 = vsyncadd [#allocation9], %s49
      %s51 = sshll.u32 [#allocation8], 4
      %s52 = int_to_ptr.vmem [resolvable:$true] %s51
      %57 = dma.hbm_to_vmem [thread:$0]  %s3, 4096, %s52, [#allocation9], 64, 64, 4
    $region17: #{tpu_custom_call.1} parent=1 // pred_fallthru
      _
    // Predicated region
    $region18: #{tpu_custom_call.1} parent=1 // pred_check
      _
    $region19: #{tpu_custom_call.1} parent=1 // pred_check_branch
      %59 = sbr.rel (0) target = $region21
    $region20: #{tpu_custom_call.1} parent=1 // pred_region
      _
    $region21: #{tpu_custom_call.1} parent=1 // pred_fallthru
      _
    // Predicated region
    $region22: #{tpu_custom_call.1} parent=1 // pred_check
      _
    $region23: #{tpu_custom_call.1} parent=1 // pred_check_branch
      %61 = sbr.rel (0) target = $region25
    $region24: #{tpu_custom_call.1} parent=1 // pred_region
      %62 = dma.done [#allocation3], 128
    $region25: #{tpu_custom_call.1} parent=1 // pred_fallthru
      _
    // Predicated region
    $region26: #{tpu_custom_call.1} parent=1 // pred_check
      _
    $region27: #{tpu_custom_call.1} parent=1 // pred_check_branch
      %64 = sbr.rel (0) target = $region29
    $region28: #{tpu_custom_call.1} parent=1 // pred_region
      %65 = dma.done [#allocation6], 1024
    $region29: #{tpu_custom_call.1} parent=1 // pred_fallthru
      _
    // Predicated region
    $region30: #{tpu_custom_call.1} parent=1 // pred_check
      _
    $region31: #{tpu_custom_call.1} parent=1 // pred_check_branch
      %67 = sbr.rel (0) target = $region33
    $region32: #{tpu_custom_call.1} parent=1 // pred_region
      %68 = dma.done [#allocation6], 64
    $region33: #{tpu_custom_call.1} parent=1 // pred_fallthru
      _
    // Predicated region
    $region34: #{tpu_custom_call.1} parent=1 // pred_check
      _
    $region35: #{tpu_custom_call.1} parent=1 // pred_check_branch
      %70 = sbr.rel (0) target = $region37
    $region36: #{tpu_custom_call.1} parent=1 // pred_region
      %71 = dma.done [#allocation9], 4096
    $region37: #{tpu_custom_call.1} parent=1 // pred_fallthru
      _
    %v73 = vld [vmem:[#allocation2] sm:$0xff]
    %v74 = vpack.c.bf16 %v73, %v73
    %v75 = vld [vmem:[#allocation5] sm:$0xff]
    %v76 = vld [vmem:[#allocation5 + $0x8] sm:$0xff]
    %v77 = vld [vmem:[#allocation5 + $0x10] sm:$0xff]
    %v78 = vld [vmem:[#allocation5 + $0x18] sm:$0xff]
    %v79 = vld [vmem:[#allocation5 + $0x20] sm:$0xff]
    %v80 = vld [vmem:[#allocation5 + $0x28] sm:$0xff]
    %v81 = vld [vmem:[#allocation5 + $0x30] sm:$0xff]
    %v82 = vld [vmem:[#allocation5 + $0x38] sm:$0xff]
    %v83 = vld [vmem:[#allocation7] sm:$0xf]
    %v85 = vlaneseq
    %v86 = vshrl.u32 %v85, 7
    %v87 = vsub.s32 0, %v86
    %v88 = vrot.slane %v83, %v87
    %v89 = vlaneseq
    %v90 = vshrl.u32 %v89, 7
    %v91 = vsub.s32 1, %v90
    %v92 = vrot.slane %v83, %v91
    %v93 = vlaneseq
    %v94 = vshrl.u32 %v93, 7
    %v95 = vsub.s32 2, %v94
    %v96 = vrot.slane %v83, %v95
    %v97 = vlaneseq
    %v98 = vshrl.u32 %v97, 7
    %v99 = vsub.s32 3, %v98
    %v100 = vrot.slane %v83, %v99
    %v113 = vunpack.c.l.b16 %v75
    %v114 = vunpack.c.h.b16 %v75
    %v115 = vunpack.c.l.b16 %v76
    %v116 = vunpack.c.h.b16 %v76
    %v117 = vunpack.c.l.b16 %v77
    %v118 = vunpack.c.h.b16 %v77
    %v119 = vunpack.c.l.b16 %v78
    %v120 = vunpack.c.h.b16 %v78
    %v121 = vunpack.c.l.b16 %v79
    %v122 = vunpack.c.h.b16 %v79
    %v123 = vunpack.c.l.b16 %v80
    %v124 = vunpack.c.h.b16 %v80
    %v125 = vunpack.c.l.b16 %v81
    %v126 = vunpack.c.h.b16 %v81
    %v127 = vunpack.c.l.b16 %v82
    %v128 = vunpack.c.h.b16 %v82
    %v129 = vpack.c.b16 %v117, %v113
    %v130 = vpack.c.b16 %v118, %v114
    %v131 = vpack.c.b16 %v119, %v115
    %v132 = vpack.c.b16 %v120, %v116
    %v133 = vpack.c.b16 %v125, %v121
    %v134 = vpack.c.b16 %v126, %v122
    %v135 = vpack.c.b16 %v127, %v123
    %v136 = vpack.c.b16 %v128, %v124
    %vm145 = vcmask 261120
    %v147 = vsel %vm145, %v74, 0
    %149 = vmatprep.subr.bf16.mxu0 0
    %150 = vmatpush1.bf16.msra.mxu0 0
    %151 = vmatprep.subr.bf16.mxu0 0
    %152 = vmatpush1.bf16.msra.mxu0 0
    %153 = vmatprep.subr.bf16.mxu0 0
    %154 = vmatpush1.bf16.msra.mxu0 0
    %155 = vmatprep.subr.bf16.mxu0 0
    %156 = vmatpush1.bf16.msra.mxu0 0
    %157 = vmatprep.subr.bf16.mxu0 0
    %158 = vmatpush1.bf16.msra.mxu0 0
    %159 = vmatprep.subr.bf16.mxu0 0
    %160 = vmatpush1.bf16.msra.mxu0 0
    %161 = vmatprep.subr.bf16.mxu0 %v134
    %162 = vmatpush1.bf16.msra.mxu0 %v133
    %163 = vmatprep.subr.bf16.mxu0 %v130
    %164 = vmatpush1.bf16.msra.mxu0 %v129
    %165 = vmatprep.subr.bf16.mxu0 0
    %166 = vmatpush2.bf16.msra.mxu0 0
    %167 = vmatprep.subr.bf16.mxu0 0
    %168 = vmatpush2.bf16.msra.mxu0 0
    %169 = vmatprep.subr.bf16.mxu0 0
    %170 = vmatpush2.bf16.msra.mxu0 0
    %171 = vmatprep.subr.bf16.mxu0 0
    %172 = vmatpush2.bf16.msra.mxu0 0
    %173 = vmatprep.subr.bf16.mxu0 0
    %174 = vmatpush2.bf16.msra.mxu0 0
    %175 = vmatprep.subr.bf16.mxu0 0
    %176 = vmatpush2.bf16.msra.mxu0 0
    %177 = vmatprep.subr.bf16.mxu0 0
    %178 = vmatpush2.bf16.msra.mxu0 0
    %179 = vmatprep.subr.bf16.mxu0 0
    %180 = vmatpush2.bf16.msra.mxu0 0
    %181 = vmatprep.mubr.bf16.mxu0 0
    %182 = vmatmul.mubr.bf16.gmra.mxu0 %v147
    %v183 = vpop.f32.mrf.mxu0
    %v184 = vadd.f32 %v88, %v183
    %v185 = vpop.f32.mrf.mxu0
    %v186 = vadd.f32 %v92, %v185
    %v187 = vpop.f32.mrf.mxu0
    %v188 = vpop.f32.mrf.mxu0
    %189 = vdwg.mxu0
    %190 = vmatprep.subr.bf16.mxu0 0
    %191 = vmatpush1.bf16.msra.mxu0 0
    %192 = vmatprep.subr.bf16.mxu0 0
    %193 = vmatpush1.bf16.msra.mxu0 0
    %194 = vmatprep.subr.bf16.mxu0 0
    %195 = vmatpush1.bf16.msra.mxu0 0
    %196 = vmatprep.subr.bf16.mxu0 0
    %197 = vmatpush1.bf16.msra.mxu0 0
    %198 = vmatprep.subr.bf16.mxu0 0
    %199 = vmatpush1.bf16.msra.mxu0 0
    %200 = vmatprep.subr.bf16.mxu0 0
    %201 = vmatpush1.bf16.msra.mxu0 0
    %202 = vmatprep.subr.bf16.mxu0 %v136
    %203 = vmatpush1.bf16.msra.mxu0 %v135
    %204 = vmatprep.subr.bf16.mxu0 %v132
    %205 = vmatpush1.bf16.msra.mxu0 %v131
    %206 = vmatprep.subr.bf16.mxu0 0
    %207 = vmatpush2.bf16.msra.mxu0 0
    %208 = vmatprep.subr.bf16.mxu0 0
    %209 = vmatpush2.bf16.msra.mxu0 0
    %210 = vmatprep.subr.bf16.mxu0 0
    %211 = vmatpush2.bf16.msra.mxu0 0
    %212 = vmatprep.subr.bf16.mxu0 0
    %213 = vmatpush2.bf16.msra.mxu0 0
    %214 = vmatprep.subr.bf16.mxu0 0
    %215 = vmatpush2.bf16.msra.mxu0 0
    %216 = vmatprep.subr.bf16.mxu0 0
    %217 = vmatpush2.bf16.msra.mxu0 0
    %218 = vmatprep.subr.bf16.mxu0 0
    %219 = vmatpush2.bf16.msra.mxu0 0
    %220 = vmatprep.subr.bf16.mxu0 0
    %221 = vmatpush2.bf16.msra.mxu0 0
    %222 = vmatprep.mubr.bf16.mxu0 0
    %223 = vmatmul.mubr.bf16.gmra.mxu0 %v147
    %v224 = vpop.f32.mrf.mxu0
    %v225 = vadd.f32 %v96, %v224
    %v226 = vpop.f32.mrf.mxu0
    %v227 = vadd.f32 %v100, %v226
    %v228 = vpop.f32.mrf.mxu0
    %v229 = vpop.f32.mrf.mxu0
    %230 = vdwg.mxu0
    %v231 = vmax.f32 %v184, 0.0
    %v232 = vmax.f32 %v186, 0.0
    %v233 = vmax.f32 %v225, 0.0
    %v234 = vmax.f32 %v227, 0.0
    %v235 = vpack.c.bf16 %v231, %v231
    %v236 = vpack.c.bf16 %v232, %v232
    %v237 = vpack.c.bf16 %v233, %v233
    %v238 = vpack.c.bf16 %v234, %v234
    %v239 = vld [vmem:[#allocation8] sm:$0xf]
    %v240 = vld [vmem:[#allocation8 + $0x4] sm:$0xf]
    %v241 = vld [vmem:[#allocation8 + $0x8] sm:$0xf]
    %v242 = vld [vmem:[#allocation8 + $0xc] sm:$0xf]
    %v243 = vld [vmem:[#allocation8 + $0x10] sm:$0xf]
    %v244 = vld [vmem:[#allocation8 + $0x14] sm:$0xf]
    %v245 = vld [vmem:[#allocation8 + $0x18] sm:$0xf]
    %v246 = vld [vmem:[#allocation8 + $0x1c] sm:$0xf]
    %v247 = vld [vmem:[#allocation8 + $0x20] sm:$0xf]
    %v248 = vld [vmem:[#allocation8 + $0x24] sm:$0xf]
    %v249 = vld [vmem:[#allocation8 + $0x28] sm:$0xf]
    %v250 = vld [vmem:[#allocation8 + $0x2c] sm:$0xf]
    %v251 = vld [vmem:[#allocation8 + $0x30] sm:$0xf]
    %v252 = vld [vmem:[#allocation8 + $0x34] sm:$0xf]
    %v253 = vld [vmem:[#allocation8 + $0x38] sm:$0xf]
    %v254 = vld [vmem:[#allocation8 + $0x3c] sm:$0xf]
    %v255 = vld [vmem:[#allocation8 + $0x40] sm:$0xf]
    %v256 = vld [vmem:[#allocation8 + $0x44] sm:$0xf]
    %v257 = vld [vmem:[#allocation8 + $0x48] sm:$0xf]
    %v258 = vld [vmem:[#allocation8 + $0x4c] sm:$0xf]
    %v259 = vld [vmem:[#allocation8 + $0x50] sm:$0xf]
    %v260 = vld [vmem:[#allocation8 + $0x54] sm:$0xf]
    %v261 = vld [vmem:[#allocation8 + $0x58] sm:$0xf]
    %v262 = vld [vmem:[#allocation8 + $0x5c] sm:$0xf]
    %v263 = vld [vmem:[#allocation8 + $0x60] sm:$0xf]
    %v264 = vld [vmem:[#allocation8 + $0x64] sm:$0xf]
    %v265 = vld [vmem:[#allocation8 + $0x68] sm:$0xf]
    %v266 = vld [vmem:[#allocation8 + $0x6c] sm:$0xf]
    %v267 = vld [vmem:[#allocation8 + $0x70] sm:$0xf]
    %v268 = vld [vmem:[#allocation8 + $0x74] sm:$0xf]
    %v269 = vld [vmem:[#allocation8 + $0x78] sm:$0xf]
    %v270 = vld [vmem:[#allocation8 + $0x7c] sm:$0xf]
    %v271 = vld [vmem:[#allocation8 + $0x80] sm:$0xf]
    %v272 = vld [vmem:[#allocation8 + $0x84] sm:$0xf]
    %v273 = vld [vmem:[#allocation8 + $0x88] sm:$0xf]
    %v274 = vld [vmem:[#allocation8 + $0x8c] sm:$0xf]
    %v275 = vld [vmem:[#allocation8 + $0x90] sm:$0xf]
    %v276 = vld [vmem:[#allocation8 + $0x94] sm:$0xf]
    %v277 = vld [vmem:[#allocation8 + $0x98] sm:$0xf]
    %v278 = vld [vmem:[#allocation8 + $0x9c] sm:$0xf]
    %v279 = vld [vmem:[#allocation8 + $0xa0] sm:$0xf]
    %v280 = vld [vmem:[#allocation8 + $0xa4] sm:$0xf]
    %v281 = vld [vmem:[#allocation8 + $0xa8] sm:$0xf]
    %v282 = vld [vmem:[#allocation8 + $0xac] sm:$0xf]
    %v283 = vld [vmem:[#allocation8 + $0xb0] sm:$0xf]
    %v284 = vld [vmem:[#allocation8 + $0xb4] sm:$0xf]
    %v285 = vld [vmem:[#allocation8 + $0xb8] sm:$0xf]
    %v286 = vld [vmem:[#allocation8 + $0xbc] sm:$0xf]
    %v287 = vld [vmem:[#allocation8 + $0xc0] sm:$0xf]
    %v288 = vld [vmem:[#allocation8 + $0xc4] sm:$0xf]
    %v289 = vld [vmem:[#allocation8 + $0xc8] sm:$0xf]
    %v290 = vld [vmem:[#allocation8 + $0xcc] sm:$0xf]
    %v291 = vld [vmem:[#allocation8 + $0xd0] sm:$0xf]
    %v292 = vld [vmem:[#allocation8 + $0xd4] sm:$0xf]
    %v293 = vld [vmem:[#allocation8 + $0xd8] sm:$0xf]
    %v294 = vld [vmem:[#allocation8 + $0xdc] sm:$0xf]
    %v295 = vld [vmem:[#allocation8 + $0xe0] sm:$0xf]
    %v296 = vld [vmem:[#allocation8 + $0xe4] sm:$0xf]
    %v297 = vld [vmem:[#allocation8 + $0xe8] sm:$0xf]
    %v298 = vld [vmem:[#allocation8 + $0xec] sm:$0xf]
    %v299 = vld [vmem:[#allocation8 + $0xf0] sm:$0xf]
    %v300 = vld [vmem:[#allocation8 + $0xf4] sm:$0xf]
    %v301 = vld [vmem:[#allocation8 + $0xf8] sm:$0xf]
    %v302 = vld [vmem:[#allocation8 + $0xfc] sm:$0xf]
    %v303 = vld [vmem:[%s4] sm:$0x1]
    %v304 = vlaneseq
    %v305 = vshrl.u32 %v304, 7
    %v306 = vsub.s32 0, %v305
    %v307 = vrot.slane %v303, %v306
    %v372 = vunpack.c.l.b16 %v239
    %v373 = vunpack.c.l.b16 %v240
    %v374 = vunpack.c.l.b16 %v241
    %v375 = vunpack.c.l.b16 %v242
    %v376 = vunpack.c.l.b16 %v243
    %v377 = vunpack.c.l.b16 %v244
    %v378 = vunpack.c.l.b16 %v245
    %v379 = vunpack.c.l.b16 %v246
    %v380 = vunpack.c.l.b16 %v247
    %v381 = vunpack.c.l.b16 %v248
    %v382 = vunpack.c.l.b16 %v249
    %v383 = vunpack.c.l.b16 %v250
    %v384 = vunpack.c.l.b16 %v251
    %v385 = vunpack.c.l.b16 %v252
    %v386 = vunpack.c.l.b16 %v253
    %v387 = vunpack.c.l.b16 %v254
    %v388 = vunpack.c.l.b16 %v255
    %v389 = vunpack.c.l.b16 %v256
    %v390 = vunpack.c.l.b16 %v257
    %v391 = vunpack.c.l.b16 %v258
    %v392 = vunpack.c.l.b16 %v259
    %v393 = vunpack.c.l.b16 %v260
    %v394 = vunpack.c.l.b16 %v261
    %v395 = vunpack.c.l.b16 %v262
    %v396 = vunpack.c.l.b16 %v263
    %v397 = vunpack.c.l.b16 %v264
    %v398 = vunpack.c.l.b16 %v265
    %v399 = vunpack.c.l.b16 %v266
    %v400 = vunpack.c.l.b16 %v267
    %v401 = vunpack.c.l.b16 %v268
    %v402 = vunpack.c.l.b16 %v269
    %v403 = vunpack.c.l.b16 %v270
    %v404 = vunpack.c.l.b16 %v271
    %v405 = vunpack.c.l.b16 %v272
    %v406 = vunpack.c.l.b16 %v273
    %v407 = vunpack.c.l.b16 %v274
    %v408 = vunpack.c.l.b16 %v275
    %v409 = vunpack.c.l.b16 %v276
    %v410 = vunpack.c.l.b16 %v277
    %v411 = vunpack.c.l.b16 %v278
    %v412 = vunpack.c.l.b16 %v279
    %v413 = vunpack.c.l.b16 %v280
    %v414 = vunpack.c.l.b16 %v281
    %v415 = vunpack.c.l.b16 %v282
    %v416 = vunpack.c.l.b16 %v283
    %v417 = vunpack.c.l.b16 %v284
    %v418 = vunpack.c.l.b16 %v285
    %v419 = vunpack.c.l.b16 %v286
    %v420 = vunpack.c.l.b16 %v287
    %v421 = vunpack.c.l.b16 %v288
    %v422 = vunpack.c.l.b16 %v289
    %v423 = vunpack.c.l.b16 %v290
    %v424 = vunpack.c.l.b16 %v291
    %v425 = vunpack.c.l.b16 %v292
    %v426 = vunpack.c.l.b16 %v293
    %v427 = vunpack.c.l.b16 %v294
    %v428 = vunpack.c.l.b16 %v295
    %v429 = vunpack.c.l.b16 %v296
    %v430 = vunpack.c.l.b16 %v297
    %v431 = vunpack.c.l.b16 %v298
    %v432 = vunpack.c.l.b16 %v299
    %v433 = vunpack.c.l.b16 %v300
    %v434 = vunpack.c.l.b16 %v301
    %v435 = vunpack.c.l.b16 %v302
    %v436 = vpack.c.b16 %v373, %v372
    %v437 = vpack.c.b16 %v375, %v374
    %v438 = vpack.c.b16 %v377, %v376
    %v439 = vpack.c.b16 %v379, %v378
    %v440 = vpack.c.b16 %v381, %v380
    %v441 = vpack.c.b16 %v383, %v382
    %v442 = vpack.c.b16 %v385, %v384
    %v443 = vpack.c.b16 %v387, %v386
    %v444 = vpack.c.b16 %v389, %v388
    %v445 = vpack.c.b16 %v391, %v390
    %v446 = vpack.c.b16 %v393, %v392
    %v447 = vpack.c.b16 %v395, %v394
    %v448 = vpack.c.b16 %v397, %v396
    %v449 = vpack.c.b16 %v399, %v398
    %v450 = vpack.c.b16 %v401, %v400
    %v451 = vpack.c.b16 %v403, %v402
    %v452 = vpack.c.b16 %v405, %v404
    %v453 = vpack.c.b16 %v407, %v406
    %v454 = vpack.c.b16 %v409, %v408
    %v455 = vpack.c.b16 %v411, %v410
    %v456 = vpack.c.b16 %v413, %v412
    %v457 = vpack.c.b16 %v415, %v414
    %v458 = vpack.c.b16 %v417, %v416
    %v459 = vpack.c.b16 %v419, %v418
    %v460 = vpack.c.b16 %v421, %v420
    %v461 = vpack.c.b16 %v423, %v422
    %v462 = vpack.c.b16 %v425, %v424
    %v463 = vpack.c.b16 %v427, %v426
    %v464 = vpack.c.b16 %v429, %v428
    %v465 = vpack.c.b16 %v431, %v430
    %v466 = vpack.c.b16 %v433, %v432
    %v467 = vpack.c.b16 %v435, %v434
    %500 = vmatprep.subr.bf16.mxu0 0
    %501 = vmatpush1.bf16.msra.mxu0 %v443
    %502 = vmatprep.subr.bf16.mxu0 0
    %503 = vmatpush1.bf16.msra.mxu0 %v442
    %504 = vmatprep.subr.bf16.mxu0 0
    %505 = vmatpush1.bf16.msra.mxu0 %v441
    %506 = vmatprep.subr.bf16.mxu0 0
    %507 = vmatpush1.bf16.msra.mxu0 %v440
    %508 = vmatprep.subr.bf16.mxu0 0
    %509 = vmatpush1.bf16.msra.mxu0 %v439
    %510 = vmatprep.subr.bf16.mxu0 0
    %511 = vmatpush1.bf16.msra.mxu0 %v438
    %512 = vmatprep.subr.bf16.mxu0 0
    %513 = vmatpush1.bf16.msra.mxu0 %v437
    %514 = vmatprep.subr.bf16.mxu0 0
    %515 = vmatpush1.bf16.msra.mxu0 %v436
    %516 = vmatprep.subr.bf16.mxu0 0
    %517 = vmatpush2.bf16.msra.mxu0 %v451
    %518 = vmatprep.subr.bf16.mxu0 0
    %519 = vmatpush2.bf16.msra.mxu0 %v450
    %520 = vmatprep.subr.bf16.mxu0 0
    %521 = vmatpush2.bf16.msra.mxu0 %v449
    %522 = vmatprep.subr.bf16.mxu0 0
    %523 = vmatpush2.bf16.msra.mxu0 %v448
    %524 = vmatprep.subr.bf16.mxu0 0
    %525 = vmatpush2.bf16.msra.mxu0 %v447
    %526 = vmatprep.subr.bf16.mxu0 0
    %527 = vmatpush2.bf16.msra.mxu0 %v446
    %528 = vmatprep.subr.bf16.mxu0 0
    %529 = vmatpush2.bf16.msra.mxu0 %v445
    %530 = vmatprep.subr.bf16.mxu0 0
    %531 = vmatpush2.bf16.msra.mxu0 %v444
    %532 = vmatprep.mubr.bf16.mxu0 %v236
    %533 = vmatmul.mubr.bf16.gmra.mxu0 %v235
    %v534 = vpop.f32.mrf.mxu0
    %v535 = vadd.f32 %v307, %v534
    %v536 = vpop.f32.mrf.mxu0
    %v537 = vpop.f32.mrf.mxu0
    %v538 = vpop.f32.mrf.mxu0
    %539 = vdwg.mxu0
    %540 = vmatprep.subr.bf16.mxu0 0
    %541 = vmatpush1.bf16.msra.mxu0 %v459
    %542 = vmatprep.subr.bf16.mxu0 0
    %543 = vmatpush1.bf16.msra.mxu0 %v458
    %544 = vmatprep.subr.bf16.mxu0 0
    %545 = vmatpush1.bf16.msra.mxu0 %v457
    %546 = vmatprep.subr.bf16.mxu0 0
    %547 = vmatpush1.bf16.msra.mxu0 %v456
    %548 = vmatprep.subr.bf16.mxu0 0
    %549 = vmatpush1.bf16.msra.mxu0 %v455
    %550 = vmatprep.subr.bf16.mxu0 0
    %551 = vmatpush1.bf16.msra.mxu0 %v454
    %552 = vmatprep.subr.bf16.mxu0 0
    %553 = vmatpush1.bf16.msra.mxu0 %v453
    %554 = vmatprep.subr.bf16.mxu0 0
    %555 = vmatpush1.bf16.msra.mxu0 %v452
    %556 = vmatprep.subr.bf16.mxu0 0
    %557 = vmatpush2.bf16.msra.mxu0 %v467
    %558 = vmatprep.subr.bf16.mxu0 0
    %559 = vmatpush2.bf16.msra.mxu0 %v466
    %560 = vmatprep.subr.bf16.mxu0 0
    %561 = vmatpush2.bf16.msra.mxu0 %v465
    %562 = vmatprep.subr.bf16.mxu0 0
    %563 = vmatpush2.bf16.msra.mxu0 %v464
    %564 = vmatprep.subr.bf16.mxu0 0
    %565 = vmatpush2.bf16.msra.mxu0 %v463
    %566 = vmatprep.subr.bf16.mxu0 0
    %567 = vmatpush2.bf16.msra.mxu0 %v462
    %568 = vmatprep.subr.bf16.mxu0 0
    %569 = vmatpush2.bf16.msra.mxu0 %v461
    %570 = vmatprep.subr.bf16.mxu0 0
    %571 = vmatpush2.bf16.msra.mxu0 %v460
    %572 = vmatprep.mubr.bf16.mxu0 %v238
    %573 = vmatmul.mubr.bf16.gmra.mxu0 %v237
    %v574 = vpop.f32.mrf.mxu0
    %v575 = vadd.f32 %v535, %v574
    %v576 = vpop.f32.mrf.mxu0
    %v577 = vpop.f32.mrf.mxu0
    %v578 = vpop.f32.mrf.mxu0
    %579 = vdwg.mxu0
    %v580 = vtanh.pop %v575
    %v581 = vld [vmem:[%s4 + $0x1] sm:$0x1]
    %v582 = vlaneseq
    %v583 = vshrl.u32 %v582, 7
    %v584 = vsub.s32 0, %v583
    %v585 = vrot.slane %v581, %v584
    %v586 = vmul.f32 %v580, %v585
    %587 = vst [vmem:[#allocation10] sm:$0xff] %v586
    // Predicated region
    $region38: #{tpu_custom_call.1} parent=1 // pred_check
      _
    $region39: #{tpu_custom_call.1} parent=1 // pred_check_branch
      %589 = sbr.rel (0) target = $region41
    $region40: #{tpu_custom_call.1} parent=1 // pred_region
      %s591 = ssub.s32 128, 128
      %592 = vsyncadd [#allocation4], %s591
      %s594 = sshll.u32 [#allocation10], 4
      %s595 = int_to_ptr.vmem [resolvable:$true] %s594
      %597 = dma.vmem_to_hbm [thread:$0]  %s595, 128, %s5, [#allocation4]
    $region41: #{tpu_custom_call.1} parent=1 // pred_fallthru
      _
    // Predicated region
    $region42: #{tpu_custom_call.1} parent=1 // pred_check
      _
    $region43: #{tpu_custom_call.1} parent=1 // pred_check_branch
      %599 = sbr.rel (0) target = $region45
    $region44: #{tpu_custom_call.1} parent=1 // pred_region
      %600 = dma.done [#allocation4], 128
    $region45: #{tpu_custom_call.1} parent=1 // pred_fallthru
      _
    %601 = vsyncpa [#allocation3], 1
    %602 = vsyncpa [#allocation6], 1
    %603 = vsyncpa [#allocation9], 1
    %604 = vsyncpa [#allocation4], 1

</llo_original>
